<compile_context>
chip_gen: v7x
topology: tpu7x:2x2x1
jax: 0.10.0
libtpu: 0.0.40
codegen_flags: <defaults>
</compile_context>

<pallas_src>
import functools

import jax
import jax.numpy as jnp
from jax.experimental import pallas as pl
from jax.experimental.pallas import tpu as pltpu


def _round_up(n, m):
    return ((n + m - 1) // m) * m


def make_mlp_kernel(layers):
    """Pallas kernel body for the MLP in batch-on-lanes layout.

    refs = (x_ref, w1, b1, ..., wL, bL, out_ref)
      x_ref : (in_dim, tile_m)           batch on lanes
      w_i   : (out_i, in_i)  if 1 < in_i and 1 < out_i   (W^T, MXU path)
              (out_i, 1)     if in_i == 1                (broadcast column)
              (in_i, 1)      if out_i == 1, in_i > 1     (reduction column)
      b_i   : (out_i, 1)
      out   : (out_dim, tile_m)
    """
    num_linear = len(layers) - 1

    def kernel(*refs):
        x_ref = refs[0]
        out_ref = refs[1 + 2 * num_linear]

        h = x_ref[...]                                     # (in_dim, tile_m) f32
        for i in range(num_linear):
            in_i, out_i = layers[i], layers[i + 1]
            w = refs[1 + 2 * i][...]
            b = refs[2 + 2 * i][...]
            if in_i == 1:
                # (out_i,1) * (1,tile_m) outer product: pure VPU broadcast FMA.
                h = w * h + b
            elif out_i == 1:
                # (in_i,1) * (in_i,tile_m) -> sum over features: VPU mul + XLU reduce.
                h = jnp.sum(w * h, axis=0, keepdims=True) + b
            else:
                # Full hidden layer: MXU matmul, f32 accumulation.
                h = jnp.dot(w, h, preferred_element_type=jnp.float32) + b
            if i < num_linear - 1:
                h = jnp.tanh(h)                            # EUP transcendental
        out_ref[...] = h.astype(out_ref.dtype)

    return kernel


def init_params(layers, key):
    """PyTorch-style uniform(+/- 1/sqrt(fan_in)) init.

    Returns a flat list [W1, b1, W2, b2, ...] in canonical JAX layout:
    W_i shaped (in_i, out_i), b_i shaped (1, out_i).
    """
    params = []
    for i in range(len(layers) - 1):
        fan_in, fan_out = layers[i], layers[i + 1]
        key, kw, kb = jax.random.split(key, 3)
        bound = 1.0 / jnp.sqrt(jnp.float32(fan_in))
        w = jax.random.uniform(kw, (fan_in, fan_out), jnp.float32, -bound, bound)
        b = jax.random.uniform(kb, (1, fan_out), jnp.float32, -bound, bound)
        params += [w, b]
    return params


def _prepare_kernel_params(params, layers):
    """Convert canonical params to the per-layer kernel layout (see kernel doc)."""
    kparams = []
    for i in range(len(layers) - 1):
        in_i, out_i = layers[i], layers[i + 1]
        w, b = params[2 * i], params[2 * i + 1]            # (in_i,out_i), (1,out_i)
        b_col = jnp.reshape(b, (out_i, 1))
        if in_i == 1:
            w_k = jnp.reshape(w, (out_i, 1))               # W^T as a column
        elif out_i == 1:
            w_k = jnp.reshape(w, (in_i, 1))                # W as a column
        else:
            w_k = jnp.transpose(w)                         # (out_i, in_i)
        kparams += [w_k, b_col]
    return kparams


@functools.partial(jax.jit, static_argnames=("layers", "tile_m"))
def gpe_box_pinn_forward(x, params, *, layers, tile_m=512):
    """Forward pass of GrossPitaevskiiBoxPINN: network(x).

    x: (N, layers[0]) float32, any N (padded internally).
    Returns (N, layers[-1]) float32.
    """
    N, in_dim = x.shape
    out_dim = layers[-1]

    # Batch rides the lane axis.  Pad N to a full-lane tile multiple so every
    # block is lane-dense (unmasked stores) and there is no ragged tail step.
    tm = tile_m if N >= tile_m else _round_up(max(N, 1), 128)
    n_pad = _round_up(N, tm)

    x_t = jnp.transpose(x)                                 # (in_dim, N)
    if n_pad != N:
        x_t = jnp.pad(x_t, ((0, 0), (0, n_pad - N)))

    kparams = _prepare_kernel_params(params, layers)

    # Batch-tiled input/output; tiny grid-invariant blocks for weights/biases.
    in_specs = [pl.BlockSpec((in_dim, tm), lambda i: (0, i))]
    for w_k, b_k in zip(kparams[0::2], kparams[1::2]):
        in_specs.append(pl.BlockSpec(w_k.shape, lambda i: (0, 0)))
        in_specs.append(pl.BlockSpec(b_k.shape, lambda i: (0, 0)))
    out_spec = pl.BlockSpec((out_dim, tm), lambda i: (0, i))

    kernel = make_mlp_kernel(layers)

    out_t = pl.pallas_call(
        kernel,
        out_shape=jax.ShapeDtypeStruct((out_dim, n_pad), jnp.float32),
        grid_spec=pltpu.PrefetchScalarGridSpec(
            num_scalar_prefetch=0,
            grid=(n_pad // tm,),
            in_specs=in_specs,
            out_specs=out_spec,
        ),
        compiler_params=pltpu.CompilerParams(
            dimension_semantics=("parallel",),   # megacore-shardable on v7x
        ),
    )(x_t, *kparams)

    return jnp.transpose(out_t[:, :N])                     # (N, out_dim)


def reference_forward(x, params, layers):
    """Plain-JAX reference of the torch nn.Sequential forward."""
    num_linear = len(layers) - 1
    h = x
    for i in range(num_linear):
        w, b = params[2 * i], params[2 * i + 1]
        h = h @ w + b
        if i < num_linear - 1:
            h = jnp.tanh(h)
    return h


if __name__ == "__main__":
    # Module-consistent shapes: 1D collocation points in a box of length L=10,
    # architecture [1, 32, 32, 1].  N=1024 with tile_m=512 gives a 2-step
    # parallel grid (one tile per TensorCore on v7x).
    layers = (1, 32, 32, 1)
    L = 10.0
    N = 1024
    key = jax.random.PRNGKey(0)
    key, kx = jax.random.split(key)

    # Collocation points x in (0, L), shape (N, 1) — the PINN's `inputs`.
    x = jax.random.uniform(kx, (N, 1), jnp.float32, 0.0, L)
    params = init_params(layers, key)

    out = gpe_box_pinn_forward(x, params, layers=layers, tile_m=512)
    out = jax.block_until_ready(out)
    ref = reference_forward(x, params, layers)
    assert out.shape == (N, layers[-1])
    assert jnp.allclose(out, ref, atol=1e-4, rtol=1e-4), "mismatch vs reference"

    # Ragged / small batch path (wrapper-side padding): boundary points etc.
    xb = jnp.array([[0.0], [L]], jnp.float32)
    out_b = jax.block_until_ready(
        gpe_box_pinn_forward(xb, params, layers=layers, tile_m=512))
    ref_b = reference_forward(xb, params, layers)
    assert out_b.shape == (2, layers[-1])
    assert jnp.allclose(out_b, ref_b, atol=1e-4, rtol=1e-4), "ragged mismatch"

    # TODO(synk): pde_loss / riesz_loss / smoothness_loss need u_x, u_xx via
    # autograd w.r.t. inputs; they are training-time losses built on this
    # forward and stay in plain JAX (jax.grad through gpe_box_pinn_forward).
    print("KERNEL_OK")
</pallas_src>

<mosaic_0001>
module attributes {stable_mosaic.version = 11 : i64} {
  func.func @kernel(%arg0: i32, %arg1: memref<1x512xf32, #tpu.memory_space<vmem>>, %arg2: memref<32x1xf32, #tpu.memory_space<vmem>>, %arg3: memref<32x1xf32, #tpu.memory_space<vmem>>, %arg4: memref<32x32xf32, #tpu.memory_space<vmem>>, %arg5: memref<32x1xf32, #tpu.memory_space<vmem>>, %arg6: memref<32x1xf32, #tpu.memory_space<vmem>>, %arg7: memref<1x1xf32, #tpu.memory_space<vmem>>, %arg8: memref<1x512xf32, #tpu.memory_space<vmem>>) attributes {dimension_semantics = [#tpu.dimension_semantics<parallel>], iteration_bounds = array<i64: 2>, scalar_prefetch = 0 : i64, scratch_operands = 0 : i64, tpu.core_type = #tpu.core_type<tc>, window_params = [{transform_indices = @transform_0, window_bounds = array<i64: 1, 512>}, {pipeline_mode = #tpu.pipeline_mode<synchronous>, transform_indices = @transform_1, window_bounds = array<i64: 32, 1>}, {pipeline_mode = #tpu.pipeline_mode<synchronous>, transform_indices = @transform_2, window_bounds = array<i64: 32, 1>}, {pipeline_mode = #tpu.pipeline_mode<synchronous>, transform_indices = @transform_3, window_bounds = array<i64: 32, 32>}, {pipeline_mode = #tpu.pipeline_mode<synchronous>, transform_indices = @transform_4, window_bounds = array<i64: 32, 1>}, {pipeline_mode = #tpu.pipeline_mode<synchronous>, transform_indices = @transform_5, window_bounds = array<i64: 32, 1>}, {pipeline_mode = #tpu.pipeline_mode<synchronous>, transform_indices = @transform_6, window_bounds = array<i64: 1, 1>}, {transform_indices = @transform_7, window_bounds = array<i64: 1, 512>}]} {
    %c0 = arith.constant 0 : index
    %c0_0 = arith.constant 0 : index
    %0 = vector.load %arg1[%c0, %c0_0] : memref<1x512xf32, #tpu.memory_space<vmem>>, vector<1x512xf32>
    %c0_1 = arith.constant 0 : index
    %c0_2 = arith.constant 0 : index
    %1 = vector.load %arg2[%c0_1, %c0_2] : memref<32x1xf32, #tpu.memory_space<vmem>>, vector<32x1xf32>
    %c0_3 = arith.constant 0 : index
    %c0_4 = arith.constant 0 : index
    %2 = vector.load %arg3[%c0_3, %c0_4] : memref<32x1xf32, #tpu.memory_space<vmem>>, vector<32x1xf32>
    %3 = vector.broadcast %1 : vector<32x1xf32> to vector<32x512xf32>
    %4 = vector.broadcast %0 : vector<1x512xf32> to vector<32x512xf32>
    %5 = arith.mulf %3, %4 : vector<32x512xf32>
    %6 = vector.broadcast %2 : vector<32x1xf32> to vector<32x512xf32>
    %7 = arith.addf %5, %6 : vector<32x512xf32>
    %8 = math.tanh %7 : vector<32x512xf32>
    %c0_5 = arith.constant 0 : index
    %c0_6 = arith.constant 0 : index
    %9 = vector.load %arg4[%c0_5, %c0_6] : memref<32x32xf32, #tpu.memory_space<vmem>>, vector<32x32xf32>
    %c0_7 = arith.constant 0 : index
    %c0_8 = arith.constant 0 : index
    %10 = vector.load %arg5[%c0_7, %c0_8] : memref<32x1xf32, #tpu.memory_space<vmem>>, vector<32x1xf32>
    %cst = arith.constant dense<0.000000e+00> : vector<32x512xf32>
    %11 = tpu.matmul %9, %8, %cst {dimension_numbers = #tpu.dot_dimension_numbers<[1], [0], [0], [1], [0, 0, 1, 1], [], []>} : vector<32x32xf32>, vector<32x512xf32>, vector<32x512xf32> -> vector<32x512xf32>
    %12 = vector.broadcast %10 : vector<32x1xf32> to vector<32x512xf32>
    %13 = arith.addf %11, %12 : vector<32x512xf32>
    %14 = math.tanh %13 : vector<32x512xf32>
    %c0_9 = arith.constant 0 : index
    %c0_10 = arith.constant 0 : index
    %15 = vector.load %arg6[%c0_9, %c0_10] : memref<32x1xf32, #tpu.memory_space<vmem>>, vector<32x1xf32>
    %c0_11 = arith.constant 0 : index
    %c0_12 = arith.constant 0 : index
    %16 = vector.load %arg7[%c0_11, %c0_12] : memref<1x1xf32, #tpu.memory_space<vmem>>, vector<1x1xf32>
    %17 = vector.broadcast %15 : vector<32x1xf32> to vector<32x512xf32>
    %18 = arith.mulf %17, %14 : vector<32x512xf32>
    %cst_13 = arith.constant dense<0.000000e+00> : vector<512xf32>
    %19 = vector.multi_reduction <add>, %18, %cst_13 [0] : vector<32x512xf32> to vector<512xf32>
    %20 = vector.shape_cast %19 : vector<512xf32> to vector<1x512xf32>
    %21 = vector.broadcast %16 : vector<1x1xf32> to vector<1x512xf32>
    %22 = arith.addf %20, %21 : vector<1x512xf32>
    %c0_14 = arith.constant 0 : index
    %c0_15 = arith.constant 0 : index
    %23 = vector.load %arg8[%c0_14, %c0_15] : memref<1x512xf32, #tpu.memory_space<vmem>>, vector<1x512xf32>
    tpu.vector_store %arg8[%c0_14, %c0_15], %22 {strides = array<i32>} : memref<1x512xf32, #tpu.memory_space<vmem>>, vector<1x512xf32>,
    return
  }
  func.func @transform_0(%arg0: i32) -> (i32, i32) {
    %c0_i32 = arith.constant 0 : i32
    %c0_i32_0 = arith.constant 0 : i32
    return %c0_i32, %arg0 : i32, i32
  }
  func.func @transform_1(%arg0: i32) -> (i32, i32) {
    %c0_i32 = arith.constant 0 : i32
    %c0_i32_0 = arith.constant 0 : i32
    %c0_i32_1 = arith.constant 0 : i32
    return %c0_i32, %c0_i32_0 : i32, i32
  }
  func.func @transform_2(%arg0: i32) -> (i32, i32) {
    %c0_i32 = arith.constant 0 : i32
    %c0_i32_0 = arith.constant 0 : i32
    %c0_i32_1 = arith.constant 0 : i32
    return %c0_i32, %c0_i32_0 : i32, i32
  }
  func.func @transform_3(%arg0: i32) -> (i32, i32) {
    %c0_i32 = arith.constant 0 : i32
    %c0_i32_0 = arith.constant 0 : i32
    %c0_i32_1 = arith.constant 0 : i32
    return %c0_i32, %c0_i32_0 : i32, i32
  }
  func.func @transform_4(%arg0: i32) -> (i32, i32) {
    %c0_i32 = arith.constant 0 : i32
    %c0_i32_0 = arith.constant 0 : i32
    %c0_i32_1 = arith.constant 0 : i32
    return %c0_i32, %c0_i32_0 : i32, i32
  }
  func.func @transform_5(%arg0: i32) -> (i32, i32) {
    %c0_i32 = arith.constant 0 : i32
    %c0_i32_0 = arith.constant 0 : i32
    %c0_i32_1 = arith.constant 0 : i32
    return %c0_i32, %c0_i32_0 : i32, i32
  }
  func.func @transform_6(%arg0: i32) -> (i32, i32) {
    %c0_i32 = arith.constant 0 : i32
    %c0_i32_0 = arith.constant 0 : i32
    %c0_i32_1 = arith.constant 0 : i32
    return %c0_i32, %c0_i32_0 : i32, i32
  }
  func.func @transform_7(%arg0: i32) -> (i32, i32) {
    %c0_i32 = arith.constant 0 : i32
    %c0_i32_0 = arith.constant 0 : i32
    return %c0_i32, %arg0 : i32, i32
  }
}

</mosaic_0001>

<llo_original>
// kernel: gpe_box_pinn_forward.1
$region0: #{gpe_box_pinn_forward.1}
  #allocation0 [shape = 'u32[]', space=smem, size = 0x4, offset = 0x4, fixed_abs, tag = 'smem constant byte address 0x4 - core index']
  #allocation1 [shape = 'u32[144,128]{1,0:T(1,128)}', space=vmem, size = 0x12000, scoped, tag = 'internal scratch']
  #allocation2 [shape = 'f32[1,1]{1,0:T(1,128)S(1)}', space=vmem, size = 0x200, scoped, tag = 'scoped memory for gpe_box_pinn_forward.1']
  %s0 = inlined_call_operand.vmem [shape: f32[1,1024], index: 0, kind: input, shape index: {}]
  %s1 = inlined_call_operand.vmem [shape: f32[32,1], index: 1, kind: input, shape index: {}]
  %s2 = inlined_call_operand.vmem [shape: f32[32,1], index: 2, kind: input, shape index: {}]
  %s3 = inlined_call_operand.vmem [shape: f32[32,32], index: 3, kind: input, shape index: {}]
  %s4 = inlined_call_operand.vmem [shape: f32[32,1], index: 4, kind: input, shape index: {}]
  %s5 = inlined_call_operand.vmem [shape: f32[32,1], index: 5, kind: input, shape index: {}]
  %s6 = inlined_call_operand.<no memory space> [shape: f32[1,1], index: 6, kind: input, shape index: {}]
  %s7 = inlined_call_operand.hbm [shape: f32[1,1024], index: 7, kind: output, shape index: {}]
  %s8 = sld [smem:[#allocation0]]
  $region61: #{gpe_box_pinn_forward.1} parent=0
    _
  %s10 = ssub.s32 1, %s8
  %s11 = scalar_select 0, %s10, %s8
  %v12 = vstv %s6
  %13 = vst [vmem:[#allocation2] sm:$0x1] %v12
  $region1: #{gpe_box_pinn_forward.1} parent=0
    #allocation3 [shape = 'u8[4096]{0}', space=vmem, size = 0x1000, scoped, tag = 'output window, operand 0']
    #allocation4 [shape = 's32[2]{0}', space=sflag, size = 0x8, scoped, tag = 'scoped memory for gpe_box_pinn_forward.1']
    %14 = vsyncpa [#allocation4], 0
    %s15 = scalar_lea.sflag [#allocation4], 1
    %16 = vsyncpa %s15, 0
    loop: start=0, step=1, limit=4
    $region2: #{gpe_box_pinn_forward.1} parent=1 // loop_pre_header
      _
    $region3: #{gpe_box_pinn_forward.1} parent=1 // loop_header
      %s18 = sphi 0, %s22
      %p19 = scmp.ge.s32.totalorder %s18, 4
      %s28 = sphi 0, %s30
      %s31 = sphi 0, %s28
      %s32 = sphi 0, %s31
      %s48 = sphi 0, %s32
      %s52 = sphi 0, %s52
      %s54 = sphi 0, %s52
      %s55 = sphi 0, %s54
      %s69 = sphi 0, %s55
      %s73 = sphi 0, %s73
      %s75 = sphi 0, %s73
      %s76 = sphi 0, %s75
      %s90 = sphi 0, %s76
      %s94 = sphi 0, %s94
      %s96 = sphi 0, %s94
      %s97 = sphi 0, %s96
      %s111 = sphi 0, %s97
      %s115 = sphi 0, %s115
      %s117 = sphi 0, %s115
      %s118 = sphi 0, %s117
      %s132 = sphi 0, %s118
      %s136 = sphi 0, %s136
      %s138 = sphi 0, %s136
      %s139 = sphi 0, %s138
      %s153 = sphi 0, %s139
      %s157 = sphi 0, %s157
      %s159 = sphi 0, %s157
      %s160 = sphi 0, %s159
      %s174 = sphi 0, %s160
      %s180 = sphi 0, %s182
      %s183 = sphi 0, %s180
      %s184 = sphi 0, %s183
      %s200 = sphi 0, %s184
    $region4: #{gpe_box_pinn_forward.1} parent=1 // loop_header_branch
      %21 = sbr.rel (%p19) target = $region8
    $region5: #{gpe_box_pinn_forward.1} parent=1 // loop_body
      %s23 = ssub.s32 %s18, 1
      %s24 = ssub.s32 %s18, 2
      %s25 = sadd.s32 %s18, 1
      %s26 = ssub.s32 %s18, %s25
      %p27 = scmp.eq.s32.totalorder %s26, 0
      %s29 = sadd.s32 %s28, 1
      %s30 = scalar_select %p27, %s28, %s29
      %p33 = pneg %p27
      %p34 = scmp.eq.s32.totalorder %s18, 1
      %p35 = por %p33, %p34
      %p36 = scmp.ne.s32.totalorder %s28, %s31
      %p37 = scmp.eq.s32.totalorder %s18, 0
      %p38 = por %p36, %p37
      %p39 = scmp.ne.s32.totalorder %s28, %s31
      %p40 = scmp.eq.s32.totalorder %s23, 1
      %p41 = por %p39, %p40
      %p42 = scmp.ne.s32.totalorder %s31, %s32
      %p43 = scmp.eq.s32.totalorder %s23, 0
      %p44 = por %p42, %p43
      %p45 = scmp.ne.s32.totalorder %s31, %s32
      %p46 = scmp.eq.s32.totalorder %s24, 1
      %p47 = por %p45, %p46
      %p49 = scmp.ne.s32.totalorder %s32, %s48
      %p50 = scmp.eq.s32.totalorder %s24, 0
      %p51 = por %p49, %p50
      %s53 = sadd.s32 %s52, 1
      %p56 = scmp.eq.s32.totalorder %s18, 1
      %p57 = scmp.ne.s32.totalorder %s52, %s54
      %p58 = scmp.eq.s32.totalorder %s18, 0
      %p59 = por %p57, %p58
      %p60 = scmp.ne.s32.totalorder %s52, %s54
      %p61 = scmp.eq.s32.totalorder %s23, 1
      %p62 = por %p60, %p61
      %p63 = scmp.ne.s32.totalorder %s54, %s55
      %p64 = scmp.eq.s32.totalorder %s23, 0
      %p65 = por %p63, %p64
      %p66 = scmp.ne.s32.totalorder %s54, %s55
      %p67 = scmp.eq.s32.totalorder %s24, 1
      %p68 = por %p66, %p67
      %p70 = scmp.ne.s32.totalorder %s55, %s69
      %p71 = scmp.eq.s32.totalorder %s24, 0
      %p72 = por %p70, %p71
      %s74 = sadd.s32 %s73, 1
      %p77 = scmp.eq.s32.totalorder %s18, 1
      %p78 = scmp.ne.s32.totalorder %s73, %s75
      %p79 = scmp.eq.s32.totalorder %s18, 0
      %p80 = por %p78, %p79
      %p81 = scmp.ne.s32.totalorder %s73, %s75
      %p82 = scmp.eq.s32.totalorder %s23, 1
      %p83 = por %p81, %p82
      %p84 = scmp.ne.s32.totalorder %s75, %s76
      %p85 = scmp.eq.s32.totalorder %s23, 0
      %p86 = por %p84, %p85
      %p87 = scmp.ne.s32.totalorder %s75, %s76
      %p88 = scmp.eq.s32.totalorder %s24, 1
      %p89 = por %p87, %p88
      %p91 = scmp.ne.s32.totalorder %s76, %s90
      %p92 = scmp.eq.s32.totalorder %s24, 0
      %p93 = por %p91, %p92
      %s95 = sadd.s32 %s94, 1
      %p98 = scmp.eq.s32.totalorder %s18, 1
      %p99 = scmp.ne.s32.totalorder %s94, %s96
      %p100 = scmp.eq.s32.totalorder %s18, 0
      %p101 = por %p99, %p100
      %p102 = scmp.ne.s32.totalorder %s94, %s96
      %p103 = scmp.eq.s32.totalorder %s23, 1
      %p104 = por %p102, %p103
      %p105 = scmp.ne.s32.totalorder %s96, %s97
      %p106 = scmp.eq.s32.totalorder %s23, 0
      %p107 = por %p105, %p106
      %p108 = scmp.ne.s32.totalorder %s96, %s97
      %p109 = scmp.eq.s32.totalorder %s24, 1
      %p110 = por %p108, %p109
      %p112 = scmp.ne.s32.totalorder %s97, %s111
      %p113 = scmp.eq.s32.totalorder %s24, 0
      %p114 = por %p112, %p113
      %s116 = sadd.s32 %s115, 1
      %p119 = scmp.eq.s32.totalorder %s18, 1
      %p120 = scmp.ne.s32.totalorder %s115, %s117
      %p121 = scmp.eq.s32.totalorder %s18, 0
      %p122 = por %p120, %p121
      %p123 = scmp.ne.s32.totalorder %s115, %s117
      %p124 = scmp.eq.s32.totalorder %s23, 1
      %p125 = por %p123, %p124
      %p126 = scmp.ne.s32.totalorder %s117, %s118
      %p127 = scmp.eq.s32.totalorder %s23, 0
      %p128 = por %p126, %p127
      %p129 = scmp.ne.s32.totalorder %s117, %s118
      %p130 = scmp.eq.s32.totalorder %s24, 1
      %p131 = por %p129, %p130
      %p133 = scmp.ne.s32.totalorder %s118, %s132
      %p134 = scmp.eq.s32.totalorder %s24, 0
      %p135 = por %p133, %p134
      %s137 = sadd.s32 %s136, 1
      %p140 = scmp.eq.s32.totalorder %s18, 1
      %p141 = scmp.ne.s32.totalorder %s136, %s138
      %p142 = scmp.eq.s32.totalorder %s18, 0
      %p143 = por %p141, %p142
      %p144 = scmp.ne.s32.totalorder %s136, %s138
      %p145 = scmp.eq.s32.totalorder %s23, 1
      %p146 = por %p144, %p145
      %p147 = scmp.ne.s32.totalorder %s138, %s139
      %p148 = scmp.eq.s32.totalorder %s23, 0
      %p149 = por %p147, %p148
      %p150 = scmp.ne.s32.totalorder %s138, %s139
      %p151 = scmp.eq.s32.totalorder %s24, 1
      %p152 = por %p150, %p151
      %p154 = scmp.ne.s32.totalorder %s139, %s153
      %p155 = scmp.eq.s32.totalorder %s24, 0
      %p156 = por %p154, %p155
      %s158 = sadd.s32 %s157, 1
      %p161 = scmp.eq.s32.totalorder %s18, 1
      %p162 = scmp.ne.s32.totalorder %s157, %s159
      %p163 = scmp.eq.s32.totalorder %s18, 0
      %p164 = por %p162, %p163
      %p165 = scmp.ne.s32.totalorder %s157, %s159
      %p166 = scmp.eq.s32.totalorder %s23, 1
      %p167 = por %p165, %p166
      %p168 = scmp.ne.s32.totalorder %s159, %s160
      %p169 = scmp.eq.s32.totalorder %s23, 0
      %p170 = por %p168, %p169
      %p171 = scmp.ne.s32.totalorder %s159, %s160
      %p172 = scmp.eq.s32.totalorder %s24, 1
      %p173 = por %p171, %p172
      %p175 = scmp.ne.s32.totalorder %s160, %s174
      %p176 = scmp.eq.s32.totalorder %s24, 0
      %p177 = por %p175, %p176
      %s178 = ssub.s32 %s18, %s25
      %p179 = scmp.eq.s32.totalorder %s178, 0
      %s181 = sadd.s32 %s180, 1
      %s182 = scalar_select %p179, %s180, %s181
      %p185 = pneg %p179
      %p186 = scmp.eq.s32.totalorder %s18, 1
      %p187 = por %p185, %p186
      %p188 = scmp.ne.s32.totalorder %s180, %s183
      %p189 = scmp.eq.s32.totalorder %s18, 0
      %p190 = por %p188, %p189
      %p191 = scmp.ne.s32.totalorder %s180, %s183
      %p192 = scmp.eq.s32.totalorder %s23, 1
      %p193 = por %p191, %p192
      %p194 = scmp.ne.s32.totalorder %s183, %s184
      %p195 = scmp.eq.s32.totalorder %s23, 0
      %p196 = por %p194, %p195
      %p197 = scmp.ne.s32.totalorder %s183, %s184
      %p198 = scmp.eq.s32.totalorder %s24, 1
      %p199 = por %p197, %p198
      %p201 = scmp.ne.s32.totalorder %s184, %s200
      %p202 = scmp.eq.s32.totalorder %s24, 0
      %p203 = por %p201, %p202
      %p204 = scmp.le.s32.totalorder 1, %s18
      %p205 = scmp.lt.s32.totalorder %s18, 3
      %p206 = pnand %p204, %p205
      %p207 = pneg %p206
      // Predicated region
      $region9: #{gpe_box_pinn_forward.1} parent=5 // pred_check
        _
      $region10: #{gpe_box_pinn_forward.1} parent=5 // pred_check_branch
        %209 = sbr.rel (%p206) target = $region12
      $region11: #{gpe_box_pinn_forward.1} parent=5 // pred_region
        %s210 = ssub.s32 %s18, 1
        // Predicated region
        $region13: #{gpe_box_pinn_forward.1} parent=11 // pred_check
          %p211 = pneg %p65
        $region14: #{gpe_box_pinn_forward.1} parent=11 // pred_check_branch
          %213 = sbr.rel (%p211) target = $region16
        $region15: #{gpe_box_pinn_forward.1} parent=11 // pred_region
          _
        $region16: #{gpe_box_pinn_forward.1} parent=11 // pred_fallthru
          _
        // Predicated region
        $region17: #{gpe_box_pinn_forward.1} parent=11 // pred_check
          %p214 = pneg %p86
        $region18: #{gpe_box_pinn_forward.1} parent=11 // pred_check_branch
          %216 = sbr.rel (%p214) target = $region20
        $region19: #{gpe_box_pinn_forward.1} parent=11 // pred_region
          _
        $region20: #{gpe_box_pinn_forward.1} parent=11 // pred_fallthru
          _
        // Predicated region
        $region21: #{gpe_box_pinn_forward.1} parent=11 // pred_check
          %p217 = pneg %p107
        $region22: #{gpe_box_pinn_forward.1} parent=11 // pred_check_branch
          %219 = sbr.rel (%p217) target = $region24
        $region23: #{gpe_box_pinn_forward.1} parent=11 // pred_region
          _
        $region24: #{gpe_box_pinn_forward.1} parent=11 // pred_fallthru
          _
        // Predicated region
        $region25: #{gpe_box_pinn_forward.1} parent=11 // pred_check
          %p220 = pneg %p128
        $region26: #{gpe_box_pinn_forward.1} parent=11 // pred_check_branch
          %222 = sbr.rel (%p220) target = $region28
        $region27: #{gpe_box_pinn_forward.1} parent=11 // pred_region
          _
        $region28: #{gpe_box_pinn_forward.1} parent=11 // pred_fallthru
          _
        // Predicated region
        $region29: #{gpe_box_pinn_forward.1} parent=11 // pred_check
          %p223 = pneg %p149
        $region30: #{gpe_box_pinn_forward.1} parent=11 // pred_check_branch
          %225 = sbr.rel (%p223) target = $region32
        $region31: #{gpe_box_pinn_forward.1} parent=11 // pred_region
          _
        $region32: #{gpe_box_pinn_forward.1} parent=11 // pred_fallthru
          _
        // Predicated region
        $region33: #{gpe_box_pinn_forward.1} parent=11 // pred_check
          %p226 = pneg %p170
        $region34: #{gpe_box_pinn_forward.1} parent=11 // pred_check_branch
          %228 = sbr.rel (%p226) target = $region36
        $region35: #{gpe_box_pinn_forward.1} parent=11 // pred_region
          _
        $region36: #{gpe_box_pinn_forward.1} parent=11 // pred_fallthru
          _
      $region12: #{gpe_box_pinn_forward.1} parent=5 // pred_fallthru
        _
      %p229 = scmp.lt.s32.totalorder %s18, 2
      // Predicated region
      $region37: #{gpe_box_pinn_forward.1} parent=5 // pred_check
        %p230 = pneg %p229
      $region38: #{gpe_box_pinn_forward.1} parent=5 // pred_check_branch
        %232 = sbr.rel (%p230) target = $region40
      $region39: #{gpe_box_pinn_forward.1} parent=5 // pred_region
        // Predicated region
        $region41: #{gpe_box_pinn_forward.1} parent=39 // pred_check
          %p233 = pneg %p38
        $region42: #{gpe_box_pinn_forward.1} parent=39 // pred_check_branch
          %235 = sbr.rel (%p233) target = $region44
        $region43: #{gpe_box_pinn_forward.1} parent=39 // pred_region
          %s236 = smul.u32 4, %s18
          %p237 = scmp.lt.s32.totalorder %s236, 7
          %s238 = scalar_select %p237, %s236, 7
          %s239 = scalar_lea.vmem %s0, %s238
          %s240 = smul.u32 4, %s18
        $region44: #{gpe_box_pinn_forward.1} parent=39 // pred_fallthru
          _
      $region40: #{gpe_box_pinn_forward.1} parent=5 // pred_fallthru
        _
      %p241 = scmp.le.s32.totalorder 1, %s18
      %p242 = scmp.lt.s32.totalorder %s18, 3
      %p243 = pnand %p241, %p242
      %p244 = pneg %p243
      // Predicated region
      $region45: #{gpe_box_pinn_forward.1} parent=5 // pred_check
        _
      $region46: #{gpe_box_pinn_forward.1} parent=5 // pred_check_branch
        %246 = sbr.rel (%p243) target = $region48
      $region47: #{gpe_box_pinn_forward.1} parent=5 // pred_region
        %s247 = ssub.s32 %s18, 1
        %s248 = smul.u32 4, %s23
        %p249 = scmp.lt.s32.totalorder %s248, 7
        %s250 = scalar_select %p249, %s248, 7
        %s251 = scalar_lea.vmem %s0, %s250
        %p252 = pneg %p44
        %p253 = pneg %p41
        %p254 = pneg %p65
        %p255 = pneg %p62
        %p256 = pneg %p86
        %p257 = pneg %p83
        %p258 = pneg %p107
        %p259 = pneg %p104
        %p260 = pneg %p128
        %p261 = pneg %p125
        %p262 = pneg %p149
        %p263 = pneg %p146
        %p264 = pneg %p170
        %p265 = pneg %p167
        %p266 = pneg %p196
        %p267 = pneg %p193
        %s268 = sand.u32 %s183, 1
        %s269 = scalar_lea.sflag [#allocation4], %s268
        %s270 = sand.u32 %s183, 1
        %s271 = smul.addr %s270, 4
        %s272 = scalar_lea.vmem [#allocation3], %s271
        %s273 = smul.u32 4, %s23
        %p274 = scmp.lt.s32.totalorder %s273, 7
        %s275 = scalar_select %p274, %s273, 7
        %s276 = scalar_lea.vmem %s0, %s275
        %s277 = smul.u32 4, %s23
        %s278 = smul.u32 4, %s23
        %v279 = vld [vmem:[%s276] sm:$0xf]
        %v280 = vld [vmem:[%s1] sm:$0xff]
        %v281 = vld [vmem:[%s1 + $0x8] sm:$0xff]
        %v282 = vld [vmem:[%s1 + $0x10] sm:$0xff]
        %v283 = vld [vmem:[%s1 + $0x18] sm:$0xff]
        %v284 = vld [vmem:[%s2] sm:$0xff]
        %v285 = vld [vmem:[%s2 + $0x8] sm:$0xff]
        %v286 = vld [vmem:[%s2 + $0x10] sm:$0xff]
        %v287 = vld [vmem:[%s2 + $0x18] sm:$0xff]
        %289 = vset.pattern.permute.xlu0 0
        %290 = vperm.xlu0 %289, %v280
        %v291 = vpop.permute.xlu0 %290
        %294 = vset.pattern.permute.xlu0 0
        %295 = vperm.xlu0 %294, %v281
        %v296 = vpop.permute.xlu0 %295
        %299 = vset.pattern.permute.xlu0 0
        %300 = vperm.xlu0 %299, %v282
        %v301 = vpop.permute.xlu0 %300
        %304 = vset.pattern.permute.xlu0 0
        %305 = vperm.xlu0 %304, %v283
        %v306 = vpop.permute.xlu0 %305
        %v309 = vlaneseq
        %v310 = vshrl.u32 %v309, 7
        %v311 = vsub.s32 0, %v310
        %v312 = vrot.slane %v279, %v311
        %v313 = vlaneseq
        %v314 = vshrl.u32 %v313, 7
        %v315 = vsub.s32 1, %v314
        %v316 = vrot.slane %v279, %v315
        %v317 = vlaneseq
        %v318 = vshrl.u32 %v317, 7
        %v319 = vsub.s32 2, %v318
        %v320 = vrot.slane %v279, %v319
        %v321 = vlaneseq
        %v322 = vshrl.u32 %v321, 7
        %v323 = vsub.s32 3, %v322
        %v324 = vrot.slane %v279, %v323
        %v329 = vmul.f32 %v291, %v312
        %v330 = vmul.f32 %v291, %v316
        %v331 = vmul.f32 %v291, %v320
        %v332 = vmul.f32 %v291, %v324
        %v333 = vmul.f32 %v296, %v312
        %v334 = vmul.f32 %v296, %v316
        %v335 = vmul.f32 %v296, %v320
        %v336 = vmul.f32 %v296, %v324
        %v337 = vmul.f32 %v301, %v312
        %v338 = vmul.f32 %v301, %v316
        %v339 = vmul.f32 %v301, %v320
        %v340 = vmul.f32 %v301, %v324
        %v341 = vmul.f32 %v306, %v312
        %v342 = vmul.f32 %v306, %v316
        %v343 = vmul.f32 %v306, %v320
        %v344 = vmul.f32 %v306, %v324
        %346 = vset.pattern.permute.xlu0 0
        %347 = vperm.xlu0 %346, %v284
        %v348 = vpop.permute.xlu0 %347
        %351 = vset.pattern.permute.xlu0 0
        %352 = vperm.xlu0 %351, %v285
        %v353 = vpop.permute.xlu0 %352
        %356 = vset.pattern.permute.xlu0 0
        %357 = vperm.xlu0 %356, %v286
        %v358 = vpop.permute.xlu0 %357
        %361 = vset.pattern.permute.xlu0 0
        %362 = vperm.xlu0 %361, %v287
        %v363 = vpop.permute.xlu0 %362
        %v365 = vadd.f32 %v329, %v348
        %v366 = vadd.f32 %v330, %v348
        %v367 = vadd.f32 %v331, %v348
        %v368 = vadd.f32 %v332, %v348
        %v369 = vadd.f32 %v333, %v353
        %v370 = vadd.f32 %v334, %v353
        %v371 = vadd.f32 %v335, %v353
        %v372 = vadd.f32 %v336, %v353
        %v373 = vadd.f32 %v337, %v358
        %v374 = vadd.f32 %v338, %v358
        %v375 = vadd.f32 %v339, %v358
        %v376 = vadd.f32 %v340, %v358
        %v377 = vadd.f32 %v341, %v363
        %v378 = vadd.f32 %v342, %v363
        %v379 = vadd.f32 %v343, %v363
        %v380 = vadd.f32 %v344, %v363
        %v381 = vtanh.pop %v365
        %v382 = vtanh.pop %v366
        %v383 = vtanh.pop %v367
        %v384 = vtanh.pop %v368
        %v385 = vtanh.pop %v369
        %v386 = vtanh.pop %v370
        %v387 = vtanh.pop %v371
        %v388 = vtanh.pop %v372
        %v389 = vtanh.pop %v373
        %v390 = vtanh.pop %v374
        %v391 = vtanh.pop %v375
        %v392 = vtanh.pop %v376
        %v393 = vtanh.pop %v377
        %v394 = vtanh.pop %v378
        %v395 = vtanh.pop %v379
        %v396 = vtanh.pop %v380
        %v397 = vld [vmem:[%s3] sm:$0xff]
        %v398 = vld [vmem:[%s3 + $0x8] sm:$0xff]
        %v399 = vld [vmem:[%s3 + $0x10] sm:$0xff]
        %v400 = vld [vmem:[%s3 + $0x18] sm:$0xff]
        %v401 = vld [vmem:[%s4] sm:$0xff]
        %v402 = vld [vmem:[%s4 + $0x8] sm:$0xff]
        %v403 = vld [vmem:[%s4 + $0x10] sm:$0xff]
        %v404 = vld [vmem:[%s4 + $0x18] sm:$0xff]
        %406 = vset.pattern.permute.xlu0 0
        %407 = vperm.xlu0 %406, %v401
        %v408 = vpop.permute.xlu0 %407
        %411 = vset.pattern.permute.xlu0 0
        %412 = vperm.xlu0 %411, %v402
        %v413 = vpop.permute.xlu0 %412
        %416 = vset.pattern.permute.xlu0 0
        %417 = vperm.xlu0 %416, %v403
        %v418 = vpop.permute.xlu0 %417
        %421 = vset.pattern.permute.xlu0 0
        %422 = vperm.xlu0 %421, %v404
        %v423 = vpop.permute.xlu0 %422
        %vm425 = vcmask 261120
        %v427 = vsel %vm425, %v397, 0
        %v430 = vsel %vm425, %v398, 0
        %v433 = vsel %vm425, %v399, 0
        %v436 = vsel %vm425, %v400, 0
        %438 = vmatprep.subr.mxu0 %v382
        %439 = vmatpush1.msra.mxu0 %v381
        %440 = vmatprep.subr.mxu0 %v386
        %441 = vmatpush1.msra.mxu0 %v385
        %442 = vmatprep.subr.mxu0 %v390
        %443 = vmatpush1.msra.mxu0 %v389
        %444 = vmatprep.subr.mxu0 %v394
        %445 = vmatpush1.msra.mxu0 %v393
        %446 = vmatprep.subr.mxu0 0.0
        %447 = vmatpush1.msra.mxu0 0.0
        %448 = vmatprep.subr.mxu0 0.0
        %449 = vmatpush1.msra.mxu0 0.0
        %450 = vmatprep.subr.mxu0 0.0
        %451 = vmatpush1.msra.mxu0 0.0
        %452 = vmatprep.subr.mxu0 0.0
        %453 = vmatpush1.msra.mxu0 0.0
        %454 = vmatprep.subr.mxu0 0.0
        %455 = vmatpush1.msra.mxu0 0.0
        %456 = vmatprep.subr.mxu0 0.0
        %457 = vmatpush1.msra.mxu0 0.0
        %458 = vmatprep.subr.mxu0 0.0
        %459 = vmatpush1.msra.mxu0 0.0
        %460 = vmatprep.subr.mxu0 0.0
        %461 = vmatpush1.msra.mxu0 0.0
        %462 = vmatprep.subr.mxu0 0.0
        %463 = vmatpush1.msra.mxu0 0.0
        %464 = vmatprep.subr.mxu0 0.0
        %465 = vmatpush1.msra.mxu0 0.0
        %466 = vmatprep.subr.mxu0 0.0
        %467 = vmatpush1.msra.mxu0 0.0
        %468 = vmatprep.subr.mxu0 0.0
        %469 = vmatpush1.msra.mxu0 0.0
        %470 = vmatprep.subr.mxu0 0.0
        %471 = vmatpush1.msra.mxu0 0.0
        %472 = vmatprep.subr.mxu0 0.0
        %473 = vmatpush1.msra.mxu0 0.0
        %474 = vmatprep.subr.mxu0 0.0
        %475 = vmatpush1.msra.mxu0 0.0
        %476 = vmatprep.subr.mxu0 0.0
        %477 = vmatpush1.msra.mxu0 0.0
        %478 = vmatprep.subr.mxu0 0.0
        %479 = vmatpush1.msra.mxu0 0.0
        %480 = vmatprep.subr.mxu0 0.0
        %481 = vmatpush1.msra.mxu0 0.0
        %482 = vmatprep.subr.mxu0 0.0
        %483 = vmatpush1.msra.mxu0 0.0
        %484 = vmatprep.subr.mxu0 0.0
        %485 = vmatpush1.msra.mxu0 0.0
        %486 = vmatprep.subr.mxu0 0.0
        %487 = vmatpush1.msra.mxu0 0.0
        %488 = vmatprep.subr.mxu0 0.0
        %489 = vmatpush1.msra.mxu0 0.0
        %490 = vmatprep.subr.mxu0 0.0
        %491 = vmatpush1.msra.mxu0 0.0
        %492 = vmatprep.subr.mxu0 0.0
        %493 = vmatpush1.msra.mxu0 0.0
        %494 = vmatprep.subr.mxu0 0.0
        %495 = vmatpush1.msra.mxu0 0.0
        %496 = vmatprep.subr.mxu0 0.0
        %497 = vmatpush1.msra.mxu0 0.0
        %498 = vmatprep.subr.mxu0 0.0
        %499 = vmatpush1.msra.mxu0 0.0
        %500 = vmatprep.subr.mxu0 0.0
        %501 = vmatpush1.msra.mxu0 0.0
        %502 = vmatprep.mubr.f32.mxu0 0.0
        %503 = vmatmul.mubr.f32.gmra.mrb[0].mxu0 %v427
        %v504 = vpop.f32.mrb[0].mxu0
        %v505 = vadd.f32 %v408, %v504
        %v506 = vpop.f32.mrb[0].mxu0
        %v507 = vadd.f32 %v408, %v506
        %508 = vmatprep.mubr.f32.mxu0 0.0
        %509 = vmatmul.mubr.f32.gmra.mrb[0].mxu0 %v430
        %v510 = vpop.f32.mrb[0].mxu0
        %v511 = vadd.f32 %v413, %v510
        %v512 = vpop.f32.mrb[0].mxu0
        %v513 = vadd.f32 %v413, %v512
        %514 = vmatprep.mubr.f32.mxu0 0.0
        %515 = vmatmul.mubr.f32.gmra.mrb[0].mxu0 %v433
        %v516 = vpop.f32.mrb[0].mxu0
        %v517 = vadd.f32 %v418, %v516
        %v518 = vpop.f32.mrb[0].mxu0
        %v519 = vadd.f32 %v418, %v518
        %520 = vmatprep.mubr.f32.mxu0 0.0
        %521 = vmatmul.mubr.f32.gmra.mrb[0].mxu0 %v436
        %v522 = vpop.f32.mrb[0].mxu0
        %v523 = vadd.f32 %v423, %v522
        %v524 = vpop.f32.mrb[0].mxu0
        %v525 = vadd.f32 %v423, %v524
        %526 = vdwg.mxu0
        %527 = vmatprep.subr.mxu0 %v384
        %528 = vmatpush1.msra.mxu0 %v383
        %529 = vmatprep.subr.mxu0 %v388
        %530 = vmatpush1.msra.mxu0 %v387
        %531 = vmatprep.subr.mxu0 %v392
        %532 = vmatpush1.msra.mxu0 %v391
        %533 = vmatprep.subr.mxu0 %v396
        %534 = vmatpush1.msra.mxu0 %v395
        %535 = vmatprep.subr.mxu0 0.0
        %536 = vmatpush1.msra.mxu0 0.0
        %537 = vmatprep.subr.mxu0 0.0
        %538 = vmatpush1.msra.mxu0 0.0
        %539 = vmatprep.subr.mxu0 0.0
        %540 = vmatpush1.msra.mxu0 0.0
        %541 = vmatprep.subr.mxu0 0.0
        %542 = vmatpush1.msra.mxu0 0.0
        %543 = vmatprep.subr.mxu0 0.0
        %544 = vmatpush1.msra.mxu0 0.0
        %545 = vmatprep.subr.mxu0 0.0
        %546 = vmatpush1.msra.mxu0 0.0
        %547 = vmatprep.subr.mxu0 0.0
        %548 = vmatpush1.msra.mxu0 0.0
        %549 = vmatprep.subr.mxu0 0.0
        %550 = vmatpush1.msra.mxu0 0.0
        %551 = vmatprep.subr.mxu0 0.0
        %552 = vmatpush1.msra.mxu0 0.0
        %553 = vmatprep.subr.mxu0 0.0
        %554 = vmatpush1.msra.mxu0 0.0
        %555 = vmatprep.subr.mxu0 0.0
        %556 = vmatpush1.msra.mxu0 0.0
        %557 = vmatprep.subr.mxu0 0.0
        %558 = vmatpush1.msra.mxu0 0.0
        %559 = vmatprep.subr.mxu0 0.0
        %560 = vmatpush1.msra.mxu0 0.0
        %561 = vmatprep.subr.mxu0 0.0
        %562 = vmatpush1.msra.mxu0 0.0
        %563 = vmatprep.subr.mxu0 0.0
        %564 = vmatpush1.msra.mxu0 0.0
        %565 = vmatprep.subr.mxu0 0.0
        %566 = vmatpush1.msra.mxu0 0.0
        %567 = vmatprep.subr.mxu0 0.0
        %568 = vmatpush1.msra.mxu0 0.0
        %569 = vmatprep.subr.mxu0 0.0
        %570 = vmatpush1.msra.mxu0 0.0
        %571 = vmatprep.subr.mxu0 0.0
        %572 = vmatpush1.msra.mxu0 0.0
        %573 = vmatprep.subr.mxu0 0.0
        %574 = vmatpush1.msra.mxu0 0.0
        %575 = vmatprep.subr.mxu0 0.0
        %576 = vmatpush1.msra.mxu0 0.0
        %577 = vmatprep.subr.mxu0 0.0
        %578 = vmatpush1.msra.mxu0 0.0
        %579 = vmatprep.subr.mxu0 0.0
        %580 = vmatpush1.msra.mxu0 0.0
        %581 = vmatprep.subr.mxu0 0.0
        %582 = vmatpush1.msra.mxu0 0.0
        %583 = vmatprep.subr.mxu0 0.0
        %584 = vmatpush1.msra.mxu0 0.0
        %585 = vmatprep.subr.mxu0 0.0
        %586 = vmatpush1.msra.mxu0 0.0
        %587 = vmatprep.subr.mxu0 0.0
        %588 = vmatpush1.msra.mxu0 0.0
        %589 = vmatprep.subr.mxu0 0.0
        %590 = vmatpush1.msra.mxu0 0.0
        %591 = vmatprep.mubr.f32.mxu0 0.0
        %592 = vmatmul.mubr.f32.gmra.mrb[0].mxu0 %v427
        %v593 = vpop.f32.mrb[0].mxu0
        %v594 = vadd.f32 %v408, %v593
        %v595 = vpop.f32.mrb[0].mxu0
        %v596 = vadd.f32 %v408, %v595
        %597 = vmatprep.mubr.f32.mxu0 0.0
        %598 = vmatmul.mubr.f32.gmra.mrb[0].mxu0 %v430
        %v599 = vpop.f32.mrb[0].mxu0
        %v600 = vadd.f32 %v413, %v599
        %v601 = vpop.f32.mrb[0].mxu0
        %v602 = vadd.f32 %v413, %v601
        %603 = vmatprep.mubr.f32.mxu0 0.0
        %604 = vmatmul.mubr.f32.gmra.mrb[0].mxu0 %v433
        %v605 = vpop.f32.mrb[0].mxu0
        %v606 = vadd.f32 %v418, %v605
        %v607 = vpop.f32.mrb[0].mxu0
        %v608 = vadd.f32 %v418, %v607
        %609 = vmatprep.mubr.f32.mxu0 0.0
        %610 = vmatmul.mubr.f32.gmra.mrb[0].mxu0 %v436
        %v611 = vpop.f32.mrb[0].mxu0
        %v612 = vadd.f32 %v423, %v611
        %v613 = vpop.f32.mrb[0].mxu0
        %v614 = vadd.f32 %v423, %v613
        %615 = vdwg.mxu0
        %v616 = vtanh.pop %v505
        %v617 = vtanh.pop %v507
        %v618 = vtanh.pop %v594
        %v619 = vtanh.pop %v596
        %v620 = vtanh.pop %v511
        %v621 = vtanh.pop %v513
        %v622 = vtanh.pop %v600
        %v623 = vtanh.pop %v602
        %v624 = vtanh.pop %v517
        %v625 = vtanh.pop %v519
        %v626 = vtanh.pop %v606
        %v627 = vtanh.pop %v608
        %v628 = vtanh.pop %v523
        %v629 = vtanh.pop %v525
        %v630 = vtanh.pop %v612
        %v631 = vtanh.pop %v614
        %v632 = vld [vmem:[%s5] sm:$0xff]
        %v633 = vld [vmem:[%s5 + $0x8] sm:$0xff]
        %v634 = vld [vmem:[%s5 + $0x10] sm:$0xff]
        %v635 = vld [vmem:[%s5 + $0x18] sm:$0xff]
        %v636 = vld [vmem:[#allocation2] sm:$0x1]
        %638 = vset.pattern.permute.xlu0 0
        %639 = vperm.xlu0 %638, %v632
        %v640 = vpop.permute.xlu0 %639
        %643 = vset.pattern.permute.xlu0 0
        %644 = vperm.xlu0 %643, %v633
        %v645 = vpop.permute.xlu0 %644
        %648 = vset.pattern.permute.xlu0 0
        %649 = vperm.xlu0 %648, %v634
        %v650 = vpop.permute.xlu0 %649
        %653 = vset.pattern.permute.xlu0 0
        %654 = vperm.xlu0 %653, %v635
        %v655 = vpop.permute.xlu0 %654
        %v657 = vmul.f32 %v640, %v616
        %v658 = vmul.f32 %v640, %v617
        %v659 = vmul.f32 %v640, %v618
        %v660 = vmul.f32 %v640, %v619
        %v661 = vmul.f32 %v645, %v620
        %v662 = vmul.f32 %v645, %v621
        %v663 = vmul.f32 %v645, %v622
        %v664 = vmul.f32 %v645, %v623
        %v665 = vmul.f32 %v650, %v624
        %v666 = vmul.f32 %v650, %v625
        %v667 = vmul.f32 %v650, %v626
        %v668 = vmul.f32 %v650, %v627
        %v669 = vmul.f32 %v655, %v628
        %v670 = vmul.f32 %v655, %v629
        %v671 = vmul.f32 %v655, %v630
        %v672 = vmul.f32 %v655, %v631
        %v673 = vadd.f32 %v657, %v661
        %v674 = vadd.f32 %v673, %v665
        %v675 = vadd.f32 %v674, %v669
        %v676 = vrot.slane %v675, 4
        %v677 = vadd.f32 %v675, %v676
        %v678 = vrot.slane %v677, 2
        %v679 = vadd.f32 %v677, %v678
        %v680 = vrot.slane %v679, 1
        %v681 = vadd.f32 %v679, %v680
        %v682 = vadd.f32 %v658, %v662
        %v683 = vadd.f32 %v682, %v666
        %v684 = vadd.f32 %v683, %v670
        %v685 = vrot.slane %v684, 4
        %v686 = vadd.f32 %v684, %v685
        %v687 = vrot.slane %v686, 2
        %v688 = vadd.f32 %v686, %v687
        %v689 = vrot.slane %v688, 1
        %v690 = vadd.f32 %v688, %v689
        %v691 = vadd.f32 %v659, %v663
        %v692 = vadd.f32 %v691, %v667
        %v693 = vadd.f32 %v692, %v671
        %v694 = vrot.slane %v693, 4
        %v695 = vadd.f32 %v693, %v694
        %v696 = vrot.slane %v695, 2
        %v697 = vadd.f32 %v695, %v696
        %v698 = vrot.slane %v697, 1
        %v699 = vadd.f32 %v697, %v698
        %v700 = vadd.f32 %v660, %v664
        %v701 = vadd.f32 %v700, %v668
        %v702 = vadd.f32 %v701, %v672
        %v703 = vrot.slane %v702, 4
        %v704 = vadd.f32 %v702, %v703
        %v705 = vrot.slane %v704, 2
        %v706 = vadd.f32 %v704, %v705
        %v707 = vrot.slane %v706, 1
        %v708 = vadd.f32 %v706, %v707
        %710 = vset.pattern.permute.xlu0 0
        %711 = vperm.xlu0 %710, %v636
        %v712 = vpop.permute.xlu0 %711
        %v714 = vlaneseq
        %v715 = vshrl.u32 %v714, 7
        %v716 = vsub.s32 0, %v715
        %v717 = vrot.slane %v712, %v716
        %v718 = vadd.f32 %v681, %v717
        %v719 = vadd.f32 %v690, %v717
        %v720 = vadd.f32 %v699, %v717
        %v721 = vadd.f32 %v708, %v717
        %v726 = vcombine.low %v718, %v719
        %v727 = vcombine.low %v720, %v721
        %v729 = vunpack.c.l.s4 1966171168
        %v730 = vunpack.c.0.s8 %v729
        %v731 = vlaneseq
        %v732 = vshrl.u32 %v731, 7
        %v733 = vsub.s32 %v730, %v732
        %v734 = vrot.slane %v726, %v733
        %v736 = vunpack.c.l.s4 1966171168
        %v737 = vunpack.c.0.s8 %v736
        %v738 = vlaneseq
        %v739 = vshrl.u32 %v738, 7
        %v740 = vsub.s32 %v737, %v739
        %v741 = vrot.slane %v727, %v740
        %v742 = vcombine.low %v734, %v741
        %v744 = vunpack.c.l.s4 1966171168
        %v745 = vunpack.c.0.s8 %v744
        %v746 = vlaneseq
        %v747 = vshrl.u32 %v746, 7
        %v748 = vsub.s32 %v745, %v747
        %v749 = vrot.slane %v742, %v748
        %v751 = vlaneseq
        %vm752 = vcmp.ge.s32.totalorder %v751, 0
        %vm753 = vcmp.lt.s32.totalorder %v751, 512
        %vm754 = vmand %vm752, %vm753
        %755 = vst.msk [vmem:[%s272] sm:$0xf] %vm754, %v749
        %s756 = sand.u32 %s183, 1
        %s757 = scalar_lea.sflag [#allocation4], %s756
        %s758 = sand.u32 %s183, 1
        %s759 = smul.addr %s758, 4
        %s760 = scalar_lea.vmem [#allocation3], %s759
        // Predicated region
        $region49: #{gpe_box_pinn_forward.1} parent=47 // pred_check
          %p761 = pneg %p193
        $region50: #{gpe_box_pinn_forward.1} parent=47 // pred_check_branch
          %763 = sbr.rel (%p761) target = $region52
        $region51: #{gpe_box_pinn_forward.1} parent=47 // pred_region
          %s764 = smul.u32 4, %s23
          %s766 = ssub.s32 64, 64
          %767 = vsyncadd %s757, %s766
          %s768 = smul.addr %s764, 16
          %s769 = scalar_lea.hbm %s7, %s768
          %s771 = sshll.u32 %s760, 4
          %s772 = int_to_ptr.vmem [resolvable:$true] %s771
          %774 = dma.vmem_to_hbm [thread:$0]  %s772, 64, %s769, %s757
        $region52: #{gpe_box_pinn_forward.1} parent=47 // pred_fallthru
          _
      $region48: #{gpe_box_pinn_forward.1} parent=5 // pred_fallthru
        _
      %p775 = scmp.le.s32.totalorder 2, %s18
      // Predicated region
      $region53: #{gpe_box_pinn_forward.1} parent=5 // pred_check
        %p776 = pneg %p775
      $region54: #{gpe_box_pinn_forward.1} parent=5 // pred_check_branch
        %778 = sbr.rel (%p776) target = $region56
      $region55: #{gpe_box_pinn_forward.1} parent=5 // pred_region
        %s779 = ssub.s32 %s18, 2
        // Predicated region
        $region57: #{gpe_box_pinn_forward.1} parent=55 // pred_check
          %p780 = pneg %p199
        $region58: #{gpe_box_pinn_forward.1} parent=55 // pred_check_branch
          %782 = sbr.rel (%p780) target = $region60
        $region59: #{gpe_box_pinn_forward.1} parent=55 // pred_region
          %s783 = sand.u32 %s184, 1
          %s784 = scalar_lea.sflag [#allocation4], %s783
          %s785 = sand.u32 %s184, 1
          %s786 = smul.addr %s785, 4
          %s787 = scalar_lea.vmem [#allocation3], %s786
          %788 = dma.done %s784, 64
        $region60: #{gpe_box_pinn_forward.1} parent=55 // pred_fallthru
          _
      $region56: #{gpe_box_pinn_forward.1} parent=5 // pred_fallthru
        _
    $region6: #{gpe_box_pinn_forward.1} parent=1 // loop_footer
      %s22 = sadd.s32 1, %s18
    $region7: #{gpe_box_pinn_forward.1} parent=1 // loop_footer_branch
      %17 = sbr.rel target = $region3
    $region8: #{gpe_box_pinn_forward.1} parent=1 // loop_exit
      _
    %789 = vsyncpa [#allocation4], 1
    %s790 = scalar_lea.sflag [#allocation4], 1
    %791 = vsyncpa %s790, 1

</llo_original>
